<compile_context>
chip_gen: v6e
topology: v6e:2x2x1
jax: 0.10.0
libtpu: 0.0.40
codegen_flags: <defaults>
</compile_context>

<pallas_src>
import numpy as np
import jax
import jax.numpy as jnp
from jax.experimental import pallas as pl
from jax.experimental.pallas import tpu as pltpu


# ----------------------------------------------------------------------------- packing
def _pack_slab(entries):
    """Pack named 2-D f32 arrays into one [R,128] slab (each block 8-row aligned).

    Returns (slab, offsets) with offsets[name] = (row_start, n_rows, n_cols).
    """
    LANES = 128
    offsets = {}
    blocks = []
    row = 0
    for name, a in entries:
        a = np.asarray(a, np.float32)
        r, c = a.shape
        assert c <= LANES, f"{name}: {c} > {LANES} lanes"
        offsets[name] = (row, r, c)
        pad_r = -(-r // 8) * 8                  # keep every block 8-row aligned
        blk = np.zeros((pad_r, LANES), np.float32)
        blk[:r, :c] = a
        blocks.append(blk)
        row += pad_r
    slab = np.concatenate(blocks, axis=0)
    return jnp.asarray(slab), offsets


# ----------------------------------------------------------------------------- kernel
def _make_kernel(offsets, *, tile_n, n_graphs, hidden, route_len):
    f32 = jnp.float32

    def kernel(x_ref, a_ref, dinv_ref, pool_ref, aux_ref, w_ref, out_ref, zbuf):
        l = pl.program_id(0)            # layer sweep: 0 -> GCN layer 1, 1 -> GCN layer 2
        i = pl.program_id(1)            # A_hat row-tile index
        n_tiles = pl.num_programs(1)

        def p(name):
            r0, nr, nc = offsets[name]
            return w_ref[r0:r0 + nr, 0:nc]      # static slice of the parameter slab

        def relu(t):
            return jnp.maximum(t, 0.0)

        def vpu_mm(a2, w2):
            # tiny [B, K] @ [K, N]: keep off the MXU (broadcast-mul + sublane reduce)
            return jnp.sum(a2[:, :, None] * w2[None, :, :], axis=1)

        # ---- one-time init: node embedding + first feature transform ----------------
        #   h0 = relu(x @ W_emb + b_emb);  z1 = dinv * (h0 @ W1)   (O(N), tiny vs N^2)
        @pl.when((l == 0) & (i == 0))
        def _():
            h0 = relu(jnp.dot(x_ref[...], p('w_emb'),
                              preferred_element_type=f32) + p('b_emb'))     # [N,128]
            z1 = dinv_ref[...] * jnp.dot(h0, p('w1'), preferred_element_type=f32)
            zbuf[0] = z1.astype(zbuf.dtype)

        # ---- streamed A row-tile pass: the only O(N^2) work --------------------------
        #   A_hat @ z  ==  dinv * (A @ (dinv * z)),  dinv*z pre-applied in zbuf.
        row0 = pl.multiple_of(i * tile_n, tile_n)
        dinv_t = dinv_ref[pl.ds(row0, tile_n), :]                            # [tile, 1]
        y = jnp.dot(a_ref[...], zbuf[l], preferred_element_type=f32)         # [tile, 128]
        bias = jnp.where(l == 0, p('b1'), p('b2'))                           # [1, 128]
        h = relu(dinv_t * y + bias)                                          # [tile, 128]

        @pl.when(l == 0)        # stage next layer's RHS:  z2 = dinv * (h1 @ W2)
        def _():
            zbuf[1, pl.ds(row0, tile_n), :] = (
                dinv_t * jnp.dot(h, p('w2'), preferred_element_type=f32)
            ).astype(zbuf.dtype)

        @pl.when(l == 1)        # stash h2 rows for the mean-pool
        def _():
            zbuf[0, pl.ds(row0, tile_n), :] = h.astype(zbuf.dtype)

        # ---- finalize (runs once): pool + B-row encoders + output head ---------------
        @pl.when((l == 1) & (i == n_tiles - 1))
        def _():
            # mean pool over each graph:  g = P @ h2
            g = jnp.dot(pool_ref[...], zbuf[0].astype(f32),
                        preferred_element_type=f32)[:, 0:hidden]             # [B, H]
            rte = aux_ref[0:n_graphs, 0:2 * route_len]                       # [B, 2L]
            spd = aux_ref[0:n_graphs, 2 * route_len:2 * route_len + 1]       # [B, 1]
            # speed encoder: Linear(1,4)+BN folded -> ReLU (pure VPU outer product)
            v = relu(spd * p('w_sp') + p('b_sp'))                            # [B, 4]
            # route encoder: Conv1d(2,1,3,p=1)+BN folded as [2L,L] matmul -> ReLU -> Linear(L,4)
            r = relu(vpu_mm(rte, p('w_cv')) + p('b_cv'))                     # [B, L]
            r = vpu_mm(r, p('w_rt')) + p('b_rt')                             # [B, 4]
            # output head: cat(g,v,r) @ W_o1 (BN folded) -> ReLU -> W_o2
            o = jnp.concatenate([g, v, r], axis=1)                           # [B, 24]
            o = relu(vpu_mm(o, p('w_o1')) + p('b_o1'))                       # [B, 16]
            out_ref[...] = vpu_mm(o, p('w_o2')) + p('b_o2')                  # [B, A]

    return kernel


# ----------------------------------------------------------------------------- params
def init_params(key, n_features, hidden, n_actions, route_len=10,
                enc_speed=4, enc_route=4, eps=1e-5):
    assert n_features <= 128 and hidden <= 128 and n_actions <= 128
    LANES = 128
    f_pad = -(-n_features // 8) * 8
    ks = jax.random.split(key, 8)

    def lin(k, fan_in, fan_out):
        bound = 1.0 / float(np.sqrt(fan_in))
        kw, kb = jax.random.split(k)
        w = jax.random.uniform(kw, (fan_in, fan_out), jnp.float32, -bound, bound)
        b = jax.random.uniform(kb, (1, fan_out), jnp.float32, -bound, bound)
        return np.asarray(w), np.asarray(b)

    # Eval-mode BatchNorm with fresh running stats (mean=0, var=1, gamma=1, beta=0):
    #   y = x*s + t with s = 1/sqrt(1+eps), t = 0  -> fold into the preceding layer.
    # NOTE: if trained running stats are loaded, recompute s = gamma/sqrt(var+eps)
    # and t = beta - mean*s and re-run this fold (otherwise numbers are wrong).
    s_bn = 1.0 / float(np.sqrt(1.0 + eps))

    def fold(w, b, scale=s_bn, shift=0.0):
        return w * scale, b * scale + shift

    w_emb, b_emb = fold(*lin(ks[0], n_features, n_features))
    w1, b1 = fold(*lin(ks[1], n_features, hidden))
    w2, b2 = fold(*lin(ks[2], hidden, hidden))
    w_sp, b_sp = fold(*lin(ks[3], 1, enc_speed))

    # Conv1d(2,1,kernel_size=3,padding=1) on length-L signals, expressed as a fixed
    # [2L, L] matrix acting on the channel-major flattened input, BN folded in.
    kcw, kcb = jax.random.split(ks[4])
    bound = 1.0 / float(np.sqrt(2 * 3))
    w_conv = np.asarray(jax.random.uniform(kcw, (1, 2, 3), jnp.float32, -bound, bound))
    b_conv = float(jax.random.uniform(kcb, (1,), jnp.float32, -bound, bound)[0])
    w_cv = np.zeros((2 * route_len, route_len), np.float32)
    for t in range(route_len):
        for c in range(2):
            for k in range(3):
                src = t + k - 1                 # padding=1
                if 0 <= src < route_len:
                    w_cv[c * route_len + src, t] += w_conv[0, c, k]
    w_cv = w_cv * s_bn
    b_cv = np.full((1, route_len), b_conv * s_bn, np.float32)

    w_rt, b_rt = lin(ks[5], route_len, enc_route)                 # no BN after these
    w_o1, b_o1 = fold(*lin(ks[6], hidden + enc_speed + enc_route, 16))
    w_o2, b_o2 = lin(ks[7], 16, n_actions)                        # no BN after final

    def blk(a, rows, cols):
        """Zero-pad a small matrix into a [rows, cols] block (lane-dense hot path)."""
        out = np.zeros((rows, cols), np.float32)
        out[:a.shape[0], :a.shape[1]] = a
        return out

    slab, offsets = _pack_slab([
        # hot-path (per-node) weights: padded so the h chain stays [*, 128] end to end
        ('w_emb', blk(w_emb, f_pad, LANES)), ('b_emb', blk(b_emb, 1, LANES)),
        ('w1', blk(w1, LANES, LANES)),       ('b1', blk(b1, 1, LANES)),
        ('w2', blk(w2, LANES, LANES)),       ('b2', blk(b2, 1, LANES)),
        # run-once head / encoder weights: true shapes
        ('w_sp', w_sp), ('b_sp', b_sp),
        ('w_cv', w_cv), ('b_cv', b_cv),
        ('w_rt', w_rt), ('b_rt', b_rt),
        ('w_o1', w_o1), ('b_o1', b_o1),
        ('w_o2', w_o2), ('b_o2', b_o2),
    ])
    return dict(slab=slab, offsets=offsets, hidden=hidden, n_actions=n_actions,
                n_features=n_features, f_pad=f_pad, route_len=route_len)


# ----------------------------------------------------------------------------- forward
def gcn_policy_forward(params, x, edge_index, edge_weight, batch_idx, speed, route,
                       num_graphs):
    n, f = x.shape
    b = num_graphs
    assert b <= 8, "pack more aux rows / add an env-batch grid axis for B > 8"
    hidden = params['hidden']
    n_actions = params['n_actions']
    f_pad = params['f_pad']
    route_len = params['route_len']
    slab = params['slab']

    tile_n = 128 if n >= 128 else 8
    n_pad = -(-n // tile_n) * tile_n
    n_tiles = n_pad // tile_n

    # --- glue: raw A+I built directly in bf16 (single N^2 write; NO normalization pass,
    #     dinv is folded into the kernel).  Edge scatter has no clean Pallas path.
    src, dst = edge_index[0], edge_index[1]
    diag = jnp.arange(n)
    a_mat = (jnp.zeros((n_pad, n_pad), jnp.bfloat16)
             .at[dst, src].add(edge_weight.astype(jnp.bfloat16))
             .at[diag, diag].add(jnp.ones((n,), jnp.bfloat16)))
    deg = (jnp.zeros((n_pad,), jnp.float32).at[dst].add(edge_weight.astype(jnp.float32))
           + (jnp.arange(n_pad) < n).astype(jnp.float32))          # + self-loop weight 1
    dinv = jnp.where(deg > 0, jax.lax.rsqrt(deg), 0.0)[:, None]    # [N_pad, 1]

    x_pad = jnp.zeros((n_pad, f_pad), jnp.float32).at[:n, :f].set(x.astype(jnp.float32))

    # --- glue: mean-aggregation pooling matrix (padded nodes get zero columns)
    bidx = jnp.concatenate([batch_idx.astype(jnp.int32),
                            jnp.full((n_pad - n,), -1, jnp.int32)])
    onehot = (jnp.arange(b)[:, None] == bidx[None, :]).astype(jnp.float32)
    pool = onehot / jnp.maximum(onehot.sum(axis=1, keepdims=True), 1.0)     # [B, N_pad]

    # --- glue: speed + route packed into ONE lane-dense [8,128] aux operand
    route_flat = jnp.transpose(route, (0, 2, 1)).reshape(b, 2 * route_len)  # NCW flatten
    aux = (jnp.zeros((8, 128), jnp.float32)
           .at[:b, 0:2 * route_len].set(route_flat.astype(jnp.float32))
           .at[:b, 2 * route_len:2 * route_len + 1].set(speed.astype(jnp.float32)))

    kernel = _make_kernel(params['offsets'], tile_n=tile_n, n_graphs=b,
                          hidden=hidden, route_len=route_len)

    grid = (2, n_tiles)     # (layer sweep, A row tile); row tile varies fastest
    in_specs = [
        pl.BlockSpec((n_pad, f_pad), lambda l, i: (0, 0)),      # x        (resident)
        pl.BlockSpec((tile_n, n_pad), lambda l, i: (i, 0)),     # A+I bf16 (streamed)
        pl.BlockSpec((n_pad, 1), lambda l, i: (0, 0)),          # dinv     (resident)
        pl.BlockSpec((b, n_pad), lambda l, i: (0, 0)),          # pool     (resident)
        pl.BlockSpec((8, 128), lambda l, i: (0, 0)),            # aux      (resident)
        pl.BlockSpec(slab.shape, lambda l, i: (0, 0)),          # weights  (resident)
    ]
    out_spec = pl.BlockSpec((b, n_actions), lambda l, i: (0, 0))

    flops = 2 * (n_pad * f_pad * 128 + 2 * n_pad * 128 * 128
                 + 2 * n_pad * n_pad * 128 + b * n_pad * 128) \
            + 2 * b * (2 * route_len * route_len + route_len * 4 + 24 * 16
                       + 16 * n_actions)
    bytes_accessed = (2 * n_pad * n_pad * 2                      # A streamed twice (bf16)
                      + (x_pad.size + dinv.size + pool.size + aux.size + slab.size) * 4
                      + b * n_actions * 4)

    # VMEM budget: A tile double-buffered + zbuf scratch + resident small operands.
    est_vmem = (2 * tile_n * n_pad * 2 + 2 * n_pad * 128 * 2
                + 2 * (x_pad.size + dinv.size + pool.size + aux.size + slab.size) * 4)
    cp_kwargs = dict(dimension_semantics=("arbitrary", "arbitrary"))
    if est_vmem > 12 * 1024 * 1024:         # only raise the scoped limit when needed
        cp_kwargs["vmem_limit_bytes"] = int(min(2 * est_vmem, 100 * 1024 * 1024))

    out = pl.pallas_call(
        kernel,
        out_shape=jax.ShapeDtypeStruct((b, n_actions), jnp.float32),
        grid=grid,
        in_specs=in_specs,
        out_specs=out_spec,
        scratch_shapes=[pltpu.VMEM((2, n_pad, 128), jnp.bfloat16)],   # z / h2 staging
        compiler_params=pltpu.CompilerParams(**cp_kwargs),
        cost_estimate=pl.CostEstimate(flops=int(flops), transcendentals=0,
                                      bytes_accessed=int(bytes_accessed)),
    )(x_pad, a_mat, dinv, pool, aux, slab)
    # TODO(synk): for many concurrent environments, add a leading "parallel" env-batch
    # grid axis and a lane-dense (>=128-wide) output slab to amortize launch/DMA cost.
    # TODO(synk): for N >> 4K, switch the final pooling to per-tile accumulation so the
    # full [N,128] h2 buffer never has to be read as one value.
    return jnp.squeeze(out)     # matches h.squeeze() in the torch module


if __name__ == "__main__":
    N_FEATURES, HIDDEN, N_ACTIONS = 8, 16, 4
    N_NODES, N_GRAPHS, N_EDGES, ROUTE_LEN = 12, 2, 24, 10

    key = jax.random.PRNGKey(0)
    ks = jax.random.split(key, 8)

    x = jax.random.normal(ks[0], (N_NODES, N_FEATURES), jnp.float32)
    src = jax.random.randint(ks[1], (N_EDGES,), 0, N_NODES)
    dst = jax.random.randint(ks[2], (N_EDGES,), 0, N_NODES)
    edge_index = jnp.stack([src, dst]).astype(jnp.int32)               # [2, E]
    edge_weight = jax.random.uniform(ks[3], (N_EDGES,), jnp.float32, 0.1, 1.0)
    batch_idx = jnp.concatenate([jnp.zeros(6, jnp.int32), jnp.ones(6, jnp.int32)])
    speed = jax.random.normal(ks[4], (N_GRAPHS, 1), jnp.float32)
    route = jax.random.normal(ks[5], (N_GRAPHS, ROUTE_LEN, 2), jnp.float32)

    params = init_params(ks[6], N_FEATURES, HIDDEN, N_ACTIONS, route_len=ROUTE_LEN)

    out = gcn_policy_forward(params, x, edge_index, edge_weight, batch_idx,
                             speed, route, N_GRAPHS)
    jax.block_until_ready(out)
    assert out.shape == (N_GRAPHS, N_ACTIONS)
    assert bool(jnp.all(jnp.isfinite(out)))
    print("KERNEL_OK")
</pallas_src>

<mosaic_0001>
module attributes {stable_mosaic.version = 11 : i64} {
  func.func @kernel(%arg0: i32, %arg1: i32, %arg2: memref<16x8xf32, #tpu.memory_space<vmem>>, %arg3: memref<8x16xbf16, #tpu.memory_space<vmem>>, %arg4: memref<16x1xf32, #tpu.memory_space<vmem>>, %arg5: memref<2x16xf32, #tpu.memory_space<vmem>>, %arg6: memref<8x128xf32, #tpu.memory_space<vmem>>, %arg7: memref<416x128xf32, #tpu.memory_space<vmem>>, %arg8: memref<2x4xf32, #tpu.memory_space<vmem>>, %arg9: memref<2x16x128xbf16, #tpu.memory_space<vmem>>) attributes {dimension_semantics = [#tpu.dimension_semantics<arbitrary>, #tpu.dimension_semantics<arbitrary>], iteration_bounds = array<i64: 2, 2>, scalar_prefetch = 0 : i64, scratch_operands = 1 : i64, tpu.core_type = #tpu.core_type<tc>, window_params = [{pipeline_mode = #tpu.pipeline_mode<synchronous>, transform_indices = @transform_0, window_bounds = array<i64: 16, 8>}, {transform_indices = @transform_1, window_bounds = array<i64: 8, 16>}, {pipeline_mode = #tpu.pipeline_mode<synchronous>, transform_indices = @transform_2, window_bounds = array<i64: 16, 1>}, {pipeline_mode = #tpu.pipeline_mode<synchronous>, transform_indices = @transform_3, window_bounds = array<i64: 2, 16>}, {pipeline_mode = #tpu.pipeline_mode<synchronous>, transform_indices = @transform_4, window_bounds = array<i64: 8, 128>}, {pipeline_mode = #tpu.pipeline_mode<synchronous>, transform_indices = @transform_5, window_bounds = array<i64: 416, 128>}, {pipeline_mode = #tpu.pipeline_mode<synchronous>, transform_indices = @transform_6, window_bounds = array<i64: 2, 4>}]} {
    %c0_i32 = arith.constant 0 : i32
    %0 = arith.cmpi eq, %arg0, %c0_i32 : i32
    %c0_i32_0 = arith.constant 0 : i32
    %1 = arith.cmpi eq, %arg1, %c0_i32_0 : i32
    %2 = arith.andi %0, %1 : i1
    %3 = arith.extui %2 : i1 to i32
    %c0_i32_1 = arith.constant 0 : i32
    %4 = arith.cmpi ne, %3, %c0_i32_1 : i32
    scf.if %4 {
      %c0_16 = arith.constant 0 : index
      %c0_17 = arith.constant 0 : index
      %35 = vector.load %arg2[%c0_16, %c0_17] : memref<16x8xf32, #tpu.memory_space<vmem>>, vector<16x8xf32>
      %c0_18 = arith.constant 0 : index
      %c0_19 = arith.constant 0 : index
      %36 = vector.load %arg7[%c0_18, %c0_19] : memref<416x128xf32, #tpu.memory_space<vmem>>, vector<8x128xf32>
      %cst_20 = arith.constant dense<0.000000e+00> : vector<16x128xf32>
      %37 = tpu.matmul %35, %36, %cst_20 {dimension_numbers = #tpu.dot_dimension_numbers<[1], [0], [0], [1], [0, 0, 1, 1], [], []>} : vector<16x8xf32>, vector<8x128xf32>, vector<16x128xf32> -> vector<16x128xf32>
      %c8 = arith.constant 8 : index
      %c0_21 = arith.constant 0 : index
      %38 = vector.load %arg7[%c8, %c0_21] : memref<416x128xf32, #tpu.memory_space<vmem>>, vector<1x128xf32>
      %39 = vector.broadcast %38 : vector<1x128xf32> to vector<16x128xf32>
      %40 = arith.addf %37, %39 : vector<16x128xf32>
      %cst_22 = arith.constant 0.000000e+00 : f32
      %41 = vector.broadcast %cst_22 : f32 to vector<16x128xf32>
      %42 = arith.maximumf %40, %41 : vector<16x128xf32>
      %c0_23 = arith.constant 0 : index
      %c0_24 = arith.constant 0 : index
      %43 = vector.load %arg4[%c0_23, %c0_24] : memref<16x1xf32, #tpu.memory_space<vmem>>, vector<16x1xf32>
      %c16 = arith.constant 16 : index
      %c0_25 = arith.constant 0 : index
      %44 = vector.load %arg7[%c16, %c0_25] : memref<416x128xf32, #tpu.memory_space<vmem>>, vector<128x128xf32>
      %cst_26 = arith.constant dense<0.000000e+00> : vector<16x128xf32>
      %45 = tpu.matmul %42, %44, %cst_26 {dimension_numbers = #tpu.dot_dimension_numbers<[1], [0], [0], [1], [0, 0, 1, 1], [], []>} : vector<16x128xf32>, vector<128x128xf32>, vector<16x128xf32> -> vector<16x128xf32>
      %46 = vector.broadcast %43 : vector<16x1xf32> to vector<16x128xf32>
      %47 = arith.mulf %46, %45 : vector<16x128xf32>
      %48 = arith.truncf %47 : vector<16x128xf32> to vector<16x128xbf16>
      %c0_27 = arith.constant 0 : index
      %c0_28 = arith.constant 0 : index
      %c0_29 = arith.constant 0 : index
      %49 = vector.load %arg9[%c0_27, %c0_28, %c0_29] : memref<2x16x128xbf16, #tpu.memory_space<vmem>>, vector<1x16x128xbf16>
      %50 = vector.shape_cast %49 : vector<1x16x128xbf16> to vector<16x128xbf16>
      %51 = vector.shape_cast %48 : vector<16x128xbf16> to vector<1x16x128xbf16>
      tpu.vector_store %arg9[%c0_27, %c0_28, %c0_29], %51 {strides = array<i32>} : memref<2x16x128xbf16, #tpu.memory_space<vmem>>, vector<1x16x128xbf16>,
    } else {
    }
    %c8_i32 = arith.constant 8 : i32
    %5 = arith.muli %arg1, %c8_i32 : i32
    %6 = tpu.assume_multiple %5, 8 : i32
    %7 = arith.index_cast %6 : i32 to index
    %c0 = arith.constant 0 : index
    %8 = vector.load %arg4[%7, %c0] : memref<16x1xf32, #tpu.memory_space<vmem>>, vector<8x1xf32>
    %c0_2 = arith.constant 0 : index
    %c0_3 = arith.constant 0 : index
    %9 = vector.load %arg3[%c0_2, %c0_3] : memref<8x16xbf16, #tpu.memory_space<vmem>>, vector<8x16xbf16>
    %10 = arith.index_cast %arg0 : i32 to index
    %c0_4 = arith.constant 0 : index
    %c0_5 = arith.constant 0 : index
    %11 = vector.load %arg9[%10, %c0_4, %c0_5] : memref<2x16x128xbf16, #tpu.memory_space<vmem>>, vector<1x16x128xbf16>
    %12 = vector.shape_cast %11 : vector<1x16x128xbf16> to vector<16x128xbf16>
    %cst = arith.constant dense<0.000000e+00> : vector<8x128xf32>
    %13 = tpu.matmul %9, %12, %cst {dimension_numbers = #tpu.dot_dimension_numbers<[1], [0], [0], [1], [0, 0, 1, 1], [], []>} : vector<8x16xbf16>, vector<16x128xbf16>, vector<8x128xf32> -> vector<8x128xf32>
    %c0_i32_6 = arith.constant 0 : i32
    %14 = arith.cmpi eq, %arg0, %c0_i32_6 : i32
    %c144 = arith.constant 144 : index
    %c0_7 = arith.constant 0 : index
    %15 = vector.load %arg7[%c144, %c0_7] : memref<416x128xf32, #tpu.memory_space<vmem>>, vector<1x128xf32>
    %c280 = arith.constant 280 : index
    %c0_8 = arith.constant 0 : index
    %16 = vector.load %arg7[%c280, %c0_8] : memref<416x128xf32, #tpu.memory_space<vmem>>, vector<1x128xf32>
    %17 = arith.select %14, %15, %16 : vector<1x128xf32>
    %18 = vector.broadcast %8 : vector<8x1xf32> to vector<8x128xf32>
    %19 = arith.mulf %18, %13 : vector<8x128xf32>
    %20 = vector.broadcast %17 : vector<1x128xf32> to vector<8x128xf32>
    %21 = arith.addf %19, %20 : vector<8x128xf32>
    %cst_9 = arith.constant 0.000000e+00 : f32
    %22 = vector.broadcast %cst_9 : f32 to vector<8x128xf32>
    %23 = arith.maximumf %21, %22 : vector<8x128xf32>
    %c0_i32_10 = arith.constant 0 : i32
    %24 = arith.cmpi eq, %arg0, %c0_i32_10 : i32
    %25 = arith.extui %24 : i1 to i32
    %c0_i32_11 = arith.constant 0 : i32
    %26 = arith.cmpi ne, %25, %c0_i32_11 : i32
    scf.if %26 {
      %c152 = arith.constant 152 : index
      %c0_16 = arith.constant 0 : index
      %35 = vector.load %arg7[%c152, %c0_16] : memref<416x128xf32, #tpu.memory_space<vmem>>, vector<128x128xf32>
      %cst_17 = arith.constant dense<0.000000e+00> : vector<8x128xf32>
      %36 = tpu.matmul %23, %35, %cst_17 {dimension_numbers = #tpu.dot_dimension_numbers<[1], [0], [0], [1], [0, 0, 1, 1], [], []>} : vector<8x128xf32>, vector<128x128xf32>, vector<8x128xf32> -> vector<8x128xf32>
      %37 = vector.broadcast %8 : vector<8x1xf32> to vector<8x128xf32>
      %38 = arith.mulf %37, %36 : vector<8x128xf32>
      %39 = arith.truncf %38 : vector<8x128xf32> to vector<8x128xbf16>
      %c1 = arith.constant 1 : index
      %40 = arith.index_cast %6 : i32 to index
      %c0_18 = arith.constant 0 : index
      %41 = vector.load %arg9[%c1, %40, %c0_18] : memref<2x16x128xbf16, #tpu.memory_space<vmem>>, vector<1x8x128xbf16>
      %42 = vector.shape_cast %41 : vector<1x8x128xbf16> to vector<8x128xbf16>
      %43 = vector.shape_cast %39 : vector<8x128xbf16> to vector<1x8x128xbf16>
      tpu.vector_store %arg9[%c1, %40, %c0_18], %43 {strides = array<i32>} : memref<2x16x128xbf16, #tpu.memory_space<vmem>>, vector<1x8x128xbf16>,
    } else {
    }
    %c1_i32 = arith.constant 1 : i32
    %27 = arith.cmpi eq, %arg0, %c1_i32 : i32
    %28 = arith.extui %27 : i1 to i32
    %c0_i32_12 = arith.constant 0 : i32
    %29 = arith.cmpi ne, %28, %c0_i32_12 : i32
    scf.if %29 {
      %35 = arith.truncf %23 : vector<8x128xf32> to vector<8x128xbf16>
      %c0_16 = arith.constant 0 : index
      %36 = arith.index_cast %6 : i32 to index
      %c0_17 = arith.constant 0 : index
      %37 = vector.load %arg9[%c0_16, %36, %c0_17] : memref<2x16x128xbf16, #tpu.memory_space<vmem>>, vector<1x8x128xbf16>
      %38 = vector.shape_cast %37 : vector<1x8x128xbf16> to vector<8x128xbf16>
      %39 = vector.shape_cast %35 : vector<8x128xbf16> to vector<1x8x128xbf16>
      tpu.vector_store %arg9[%c0_16, %36, %c0_17], %39 {strides = array<i32>} : memref<2x16x128xbf16, #tpu.memory_space<vmem>>, vector<1x8x128xbf16>,
    } else {
    }
    %c1_i32_13 = arith.constant 1 : i32
    %30 = arith.cmpi eq, %arg0, %c1_i32_13 : i32
    %c1_i32_14 = arith.constant 1 : i32
    %31 = arith.cmpi eq, %arg1, %c1_i32_14 : i32
    %32 = arith.andi %30, %31 : i1
    %33 = arith.extui %32 : i1 to i32
    %c0_i32_15 = arith.constant 0 : i32
    %34 = arith.cmpi ne, %33, %c0_i32_15 : i32
    scf.if %34 {
      %c0_16 = arith.constant 0 : index
      %c0_17 = arith.constant 0 : index
      %35 = vector.load %arg5[%c0_16, %c0_17] : memref<2x16xf32, #tpu.memory_space<vmem>>, vector<2x16xf32>
      %c0_18 = arith.constant 0 : index
      %c0_19 = arith.constant 0 : index
      %c0_20 = arith.constant 0 : index
      %36 = vector.load %arg9[%c0_18, %c0_19, %c0_20] : memref<2x16x128xbf16, #tpu.memory_space<vmem>>, vector<1x16x128xbf16>
      %37 = vector.shape_cast %36 : vector<1x16x128xbf16> to vector<16x128xbf16>
      %38 = arith.extf %37 : vector<16x128xbf16> to vector<16x128xf32>
      %cst_21 = arith.constant dense<0.000000e+00> : vector<2x128xf32>
      %39 = tpu.matmul %35, %38, %cst_21 {dimension_numbers = #tpu.dot_dimension_numbers<[1], [0], [0], [1], [0, 0, 1, 1], [], []>} : vector<2x16xf32>, vector<16x128xf32>, vector<2x128xf32> -> vector<2x128xf32>
      %40 = vector.extract_strided_slice %39 {offsets = [0, 0], sizes = [2, 16], strides = [1, 1]} : vector<2x128xf32> to vector<2x16xf32>
      %c0_22 = arith.constant 0 : index
      %c0_23 = arith.constant 0 : index
      %41 = vector.load %arg6[%c0_22, %c0_23] : memref<8x128xf32, #tpu.memory_space<vmem>>, vector<2x20xf32>
      %c0_24 = arith.constant 0 : index
      %c20 = arith.constant 20 : index
      %42 = vector.load %arg6[%c0_24, %c20] : memref<8x128xf32, #tpu.memory_space<vmem>>, vector<2x1xf32>
      %c288 = arith.constant 288 : index
      %c0_25 = arith.constant 0 : index
      %43 = vector.load %arg7[%c288, %c0_25] : memref<416x128xf32, #tpu.memory_space<vmem>>, vector<1x4xf32>
      %44 = vector.broadcast %42 : vector<2x1xf32> to vector<2x4xf32>
      %45 = vector.broadcast %43 : vector<1x4xf32> to vector<2x4xf32>
      %46 = arith.mulf %44, %45 : vector<2x4xf32>
      %c296 = arith.constant 296 : index
      %c0_26 = arith.constant 0 : index
      %47 = vector.load %arg7[%c296, %c0_26] : memref<416x128xf32, #tpu.memory_space<vmem>>, vector<1x4xf32>
      %48 = vector.broadcast %47 : vector<1x4xf32> to vector<2x4xf32>
      %49 = arith.addf %46, %48 : vector<2x4xf32>
      %cst_27 = arith.constant 0.000000e+00 : f32
      %50 = vector.broadcast %cst_27 : f32 to vector<2x4xf32>
      %51 = arith.maximumf %49, %50 : vector<2x4xf32>
      %c304 = arith.constant 304 : index
      %c0_28 = arith.constant 0 : index
      %52 = vector.load %arg7[%c304, %c0_28] : memref<416x128xf32, #tpu.memory_space<vmem>>, vector<20x10xf32>
      %53 = vector.shape_cast %41 : vector<2x20xf32> to vector<2x20x1xf32>
      %54 = vector.shape_cast %52 : vector<20x10xf32> to vector<1x20x10xf32>
      %55 = vector.broadcast %53 : vector<2x20x1xf32> to vector<2x20x10xf32>
      %56 = vector.broadcast %54 : vector<1x20x10xf32> to vector<2x20x10xf32>
      %57 = arith.mulf %55, %56 : vector<2x20x10xf32>
      %cst_29 = arith.constant dense<0.000000e+00> : vector<2x10xf32>
      %58 = vector.multi_reduction <add>, %57, %cst_29 [1] : vector<2x20x10xf32> to vector<2x10xf32>
      %c328 = arith.constant 328 : index
      %c0_30 = arith.constant 0 : index
      %59 = vector.load %arg7[%c328, %c0_30] : memref<416x128xf32, #tpu.memory_space<vmem>>, vector<1x10xf32>
      %60 = vector.broadcast %59 : vector<1x10xf32> to vector<2x10xf32>
      %61 = arith.addf %58, %60 : vector<2x10xf32>
      %cst_31 = arith.constant 0.000000e+00 : f32
      %62 = vector.broadcast %cst_31 : f32 to vector<2x10xf32>
      %63 = arith.maximumf %61, %62 : vector<2x10xf32>
      %c336 = arith.constant 336 : index
      %c0_32 = arith.constant 0 : index
      %64 = vector.load %arg7[%c336, %c0_32] : memref<416x128xf32, #tpu.memory_space<vmem>>, vector<10x4xf32>
      %65 = vector.shape_cast %63 : vector<2x10xf32> to vector<2x10x1xf32>
      %66 = vector.shape_cast %64 : vector<10x4xf32> to vector<1x10x4xf32>
      %67 = vector.broadcast %65 : vector<2x10x1xf32> to vector<2x10x4xf32>
      %68 = vector.broadcast %66 : vector<1x10x4xf32> to vector<2x10x4xf32>
      %69 = arith.mulf %67, %68 : vector<2x10x4xf32>
      %cst_33 = arith.constant dense<0.000000e+00> : vector<2x4xf32>
      %70 = vector.multi_reduction <add>, %69, %cst_33 [1] : vector<2x10x4xf32> to vector<2x4xf32>
      %c352 = arith.constant 352 : index
      %c0_34 = arith.constant 0 : index
      %71 = vector.load %arg7[%c352, %c0_34] : memref<416x128xf32, #tpu.memory_space<vmem>>, vector<1x4xf32>
      %72 = vector.broadcast %71 : vector<1x4xf32> to vector<2x4xf32>
      %73 = arith.addf %70, %72 : vector<2x4xf32>
      %74 = tpu.concatenate %40, %51, %73 in 1 : vector<2x16xf32>, vector<2x4xf32>, vector<2x4xf32> -> vector<2x24xf32>
      %c360 = arith.constant 360 : index
      %c0_35 = arith.constant 0 : index
      %75 = vector.load %arg7[%c360, %c0_35] : memref<416x128xf32, #tpu.memory_space<vmem>>, vector<24x16xf32>
      %76 = vector.shape_cast %74 : vector<2x24xf32> to vector<2x24x1xf32>
      %77 = vector.shape_cast %75 : vector<24x16xf32> to vector<1x24x16xf32>
      %78 = vector.broadcast %76 : vector<2x24x1xf32> to vector<2x24x16xf32>
      %79 = vector.broadcast %77 : vector<1x24x16xf32> to vector<2x24x16xf32>
      %80 = arith.mulf %78, %79 : vector<2x24x16xf32>
      %cst_36 = arith.constant dense<0.000000e+00> : vector<2x16xf32>
      %81 = vector.multi_reduction <add>, %80, %cst_36 [1] : vector<2x24x16xf32> to vector<2x16xf32>
      %c384 = arith.constant 384 : index
      %c0_37 = arith.constant 0 : index
      %82 = vector.load %arg7[%c384, %c0_37] : memref<416x128xf32, #tpu.memory_space<vmem>>, vector<1x16xf32>
      %83 = vector.broadcast %82 : vector<1x16xf32> to vector<2x16xf32>
      %84 = arith.addf %81, %83 : vector<2x16xf32>
      %cst_38 = arith.constant 0.000000e+00 : f32
      %85 = vector.broadcast %cst_38 : f32 to vector<2x16xf32>
      %86 = arith.maximumf %84, %85 : vector<2x16xf32>
      %c392 = arith.constant 392 : index
      %c0_39 = arith.constant 0 : index
      %87 = vector.load %arg7[%c392, %c0_39] : memref<416x128xf32, #tpu.memory_space<vmem>>, vector<16x4xf32>
      %88 = vector.shape_cast %86 : vector<2x16xf32> to vector<2x16x1xf32>
      %89 = vector.shape_cast %87 : vector<16x4xf32> to vector<1x16x4xf32>
      %90 = vector.broadcast %88 : vector<2x16x1xf32> to vector<2x16x4xf32>
      %91 = vector.broadcast %89 : vector<1x16x4xf32> to vector<2x16x4xf32>
      %92 = arith.mulf %90, %91 : vector<2x16x4xf32>
      %cst_40 = arith.constant dense<0.000000e+00> : vector<2x4xf32>
      %93 = vector.multi_reduction <add>, %92, %cst_40 [1] : vector<2x16x4xf32> to vector<2x4xf32>
      %c408 = arith.constant 408 : index
      %c0_41 = arith.constant 0 : index
      %94 = vector.load %arg7[%c408, %c0_41] : memref<416x128xf32, #tpu.memory_space<vmem>>, vector<1x4xf32>
      %95 = vector.broadcast %94 : vector<1x4xf32> to vector<2x4xf32>
      %96 = arith.addf %93, %95 : vector<2x4xf32>
      %c0_42 = arith.constant 0 : index
      %c0_43 = arith.constant 0 : index
      %97 = vector.load %arg8[%c0_42, %c0_43] : memref<2x4xf32, #tpu.memory_space<vmem>>, vector<2x4xf32>
      tpu.vector_store %arg8[%c0_42, %c0_43], %96 {strides = array<i32>} : memref<2x4xf32, #tpu.memory_space<vmem>>, vector<2x4xf32>,
    } else {
    }
    return
  }
  func.func @transform_0(%arg0: i32, %arg1: i32) -> (i32, i32) {
    %c0_i32 = arith.constant 0 : i32
    %c0_i32_0 = arith.constant 0 : i32
    %c0_i32_1 = arith.constant 0 : i32
    return %c0_i32, %c0_i32_0 : i32, i32
  }
  func.func @transform_1(%arg0: i32, %arg1: i32) -> (i32, i32) {
    %c0_i32 = arith.constant 0 : i32
    %c0_i32_0 = arith.constant 0 : i32
    return %arg1, %c0_i32 : i32, i32
  }
  func.func @transform_2(%arg0: i32, %arg1: i32) -> (i32, i32) {
    %c0_i32 = arith.constant 0 : i32
    %c0_i32_0 = arith.constant 0 : i32
    %c0_i32_1 = arith.constant 0 : i32
    return %c0_i32, %c0_i32_0 : i32, i32
  }
  func.func @transform_3(%arg0: i32, %arg1: i32) -> (i32, i32) {
    %c0_i32 = arith.constant 0 : i32
    %c0_i32_0 = arith.constant 0 : i32
    %c0_i32_1 = arith.constant 0 : i32
    return %c0_i32, %c0_i32_0 : i32, i32
  }
  func.func @transform_4(%arg0: i32, %arg1: i32) -> (i32, i32) {
    %c0_i32 = arith.constant 0 : i32
    %c0_i32_0 = arith.constant 0 : i32
    %c0_i32_1 = arith.constant 0 : i32
    return %c0_i32, %c0_i32_0 : i32, i32
  }
  func.func @transform_5(%arg0: i32, %arg1: i32) -> (i32, i32) {
    %c0_i32 = arith.constant 0 : i32
    %c0_i32_0 = arith.constant 0 : i32
    %c0_i32_1 = arith.constant 0 : i32
    return %c0_i32, %c0_i32_0 : i32, i32
  }
  func.func @transform_6(%arg0: i32, %arg1: i32) -> (i32, i32) {
    %c0_i32 = arith.constant 0 : i32
    %c0_i32_0 = arith.constant 0 : i32
    %c0_i32_1 = arith.constant 0 : i32
    return %c0_i32, %c0_i32_0 : i32, i32
  }
}

</mosaic_0001>

<llo_original>
// kernel: tpu_custom_call.1
$region0: #{tpu_custom_call.1}
  #allocation0 [shape = 'u32[]', space=smem, size = 0x4, offset = 0x4, fixed_abs, tag = 'smem constant byte address 0x4 - core index']
  #allocation1 [shape = 'u32[144,128]{1,0:T(1,128)}', space=vmem, size = 0x12000, scoped, tag = 'internal scratch']
  #allocation2 [shape = 'bf16[2,16,128]{2,1,0:T(8,128)(2,1)}', space=vmem, size = 0x2000, scoped, tag = 'scratch operand']
  %s0 = inlined_call_operand.vmem [shape: f32[16,8], index: 0, kind: input, shape index: {}]
  %s1 = inlined_call_operand.vmem [shape: bf16[16,16], index: 1, kind: input, shape index: {}]
  %s2 = inlined_call_operand.vmem [shape: f32[16,1], index: 2, kind: input, shape index: {}]
  %s3 = inlined_call_operand.vmem [shape: f32[2,16], index: 3, kind: input, shape index: {}]
  %s4 = inlined_call_operand.vmem [shape: f32[8,128], index: 4, kind: input, shape index: {}]
  %s5 = inlined_call_operand.hbm [shape: f32[416,128], index: 5, kind: input, shape index: {}]
  %s6 = inlined_call_operand.hbm [shape: f32[2,4], index: 6, kind: output, shape index: {}]
  %s7 = sld [smem:[#allocation0]]
  $region77: #{tpu_custom_call.1} parent=0
    _
  %s9 = ssub.s32 1, %s7
  %s10 = scalar_select 0, %s9, %s7
  $region1: #{tpu_custom_call.1} parent=0
    #allocation3 [shape = 'u8[212992]{0}', space=vmem, size = 0x34000, scoped, tag = 'input window, operand 5, single buffered']
    #allocation4 [shape = 's32[2]{0}', space=sflag, size = 0x8, scoped, tag = 'scoped memory for tpu_custom_call.1']
    #allocation5 [shape = 's32[2]{0}', space=sflag, size = 0x8, scoped, tag = 'scoped memory for tpu_custom_call.1']
    #allocation6 [shape = 'u8[1024]{0}', space=vmem, size = 0x400, scoped, tag = 'output window, operand 0, single buffered']
    %11 = vsyncpa [#allocation4], 0
    %12 = vsyncpa [#allocation5], 0
    loop: start=0, step=1, limit=6
    $region2: #{tpu_custom_call.1} parent=1 // loop_pre_header
      _
    $region3: #{tpu_custom_call.1} parent=1 // loop_header
      %s14 = sphi 0, %s18
      %p15 = scmp.ge.s32.totalorder %s14, 6
      %s21 = sphi 0, %s33
      %s22 = sphi 0, %s29
      %s23 = sphi 0, %s21
      %s24 = sphi 0, %s22
      %s25 = sphi 0, %s23
      %s26 = sphi 0, %s24
      %s34 = sphi 0, %s34
      %s36 = sphi 0, %s34
      %s37 = sphi 0, %s36
      %s51 = sphi 0, %s37
      %s57 = sphi 0, %s59
      %s60 = sphi 0, %s57
      %s61 = sphi 0, %s60
      %s77 = sphi 0, %s61
      %s81 = sphi 0, %s81
      %s83 = sphi 0, %s81
      %s84 = sphi 0, %s83
      %s98 = sphi 0, %s84
      %s102 = sphi 0, %s102
      %s104 = sphi 0, %s102
      %s105 = sphi 0, %s104
      %s119 = sphi 0, %s105
      %s123 = sphi 0, %s123
      %s125 = sphi 0, %s123
      %s126 = sphi 0, %s125
      %s140 = sphi 0, %s126
      %s144 = sphi 0, %s144
      %s146 = sphi 0, %s144
      %s147 = sphi 0, %s146
      %s161 = sphi 0, %s147
      %s165 = sphi 0, %s165
      %s167 = sphi 0, %s165
      %s168 = sphi 0, %s167
      %s182 = sphi 0, %s168
    $region4: #{tpu_custom_call.1} parent=1 // loop_header_branch
      %17 = sbr.rel (%p15) target = $region8
    $region5: #{tpu_custom_call.1} parent=1 // loop_body
      %s19 = ssub.s32 %s14, 1
      %s20 = ssub.s32 %s14, 2
      %s27 = sadd.s32 1, %s22
      %p28 = scmp.ge.s32.totalorder %s27, 2
      %s29 = scalar_select %p28, 0, %s27
      %s30 = sadd.s32 1, %s21
      %s31 = scalar_select %p28, %s30, %s21
      %p32 = scmp.ge.s32.totalorder %s31, 2
      %s33 = scalar_select %p32, 0, %s31
      %s35 = sadd.s32 %s34, 1
      %p38 = scmp.eq.s32.totalorder %s14, 3
      %p39 = scmp.ne.s32.totalorder %s34, %s36
      %p40 = scmp.eq.s32.totalorder %s14, 0
      %p41 = por %p39, %p40
      %p42 = scmp.ne.s32.totalorder %s34, %s36
      %p43 = scmp.eq.s32.totalorder %s19, 3
      %p44 = por %p42, %p43
      %p45 = scmp.ne.s32.totalorder %s36, %s37
      %p46 = scmp.eq.s32.totalorder %s19, 0
      %p47 = por %p45, %p46
      %p48 = scmp.ne.s32.totalorder %s36, %s37
      %p49 = scmp.eq.s32.totalorder %s20, 3
      %p50 = por %p48, %p49
      %p52 = scmp.ne.s32.totalorder %s37, %s51
      %p53 = scmp.eq.s32.totalorder %s20, 0
      %p54 = por %p52, %p53
      %s55 = ssub.s32 %s22, %s29
      %p56 = scmp.eq.s32.totalorder %s55, 0
      %s58 = sadd.s32 %s57, 1
      %s59 = scalar_select %p56, %s57, %s58
      %p62 = pneg %p56
      %p63 = scmp.eq.s32.totalorder %s14, 3
      %p64 = por %p62, %p63
      %p65 = scmp.ne.s32.totalorder %s57, %s60
      %p66 = scmp.eq.s32.totalorder %s14, 0
      %p67 = por %p65, %p66
      %p68 = scmp.ne.s32.totalorder %s57, %s60
      %p69 = scmp.eq.s32.totalorder %s19, 3
      %p70 = por %p68, %p69
      %p71 = scmp.ne.s32.totalorder %s60, %s61
      %p72 = scmp.eq.s32.totalorder %s19, 0
      %p73 = por %p71, %p72
      %p74 = scmp.ne.s32.totalorder %s60, %s61
      %p75 = scmp.eq.s32.totalorder %s20, 3
      %p76 = por %p74, %p75
      %p78 = scmp.ne.s32.totalorder %s61, %s77
      %p79 = scmp.eq.s32.totalorder %s20, 0
      %p80 = por %p78, %p79
      %s82 = sadd.s32 %s81, 1
      %p85 = scmp.eq.s32.totalorder %s14, 3
      %p86 = scmp.ne.s32.totalorder %s81, %s83
      %p87 = scmp.eq.s32.totalorder %s14, 0
      %p88 = por %p86, %p87
      %p89 = scmp.ne.s32.totalorder %s81, %s83
      %p90 = scmp.eq.s32.totalorder %s19, 3
      %p91 = por %p89, %p90
      %p92 = scmp.ne.s32.totalorder %s83, %s84
      %p93 = scmp.eq.s32.totalorder %s19, 0
      %p94 = por %p92, %p93
      %p95 = scmp.ne.s32.totalorder %s83, %s84
      %p96 = scmp.eq.s32.totalorder %s20, 3
      %p97 = por %p95, %p96
      %p99 = scmp.ne.s32.totalorder %s84, %s98
      %p100 = scmp.eq.s32.totalorder %s20, 0
      %p101 = por %p99, %p100
      %s103 = sadd.s32 %s102, 1
      %p106 = scmp.eq.s32.totalorder %s14, 3
      %p107 = scmp.ne.s32.totalorder %s102, %s104
      %p108 = scmp.eq.s32.totalorder %s14, 0
      %p109 = por %p107, %p108
      %p110 = scmp.ne.s32.totalorder %s102, %s104
      %p111 = scmp.eq.s32.totalorder %s19, 3
      %p112 = por %p110, %p111
      %p113 = scmp.ne.s32.totalorder %s104, %s105
      %p114 = scmp.eq.s32.totalorder %s19, 0
      %p115 = por %p113, %p114
      %p116 = scmp.ne.s32.totalorder %s104, %s105
      %p117 = scmp.eq.s32.totalorder %s20, 3
      %p118 = por %p116, %p117
      %p120 = scmp.ne.s32.totalorder %s105, %s119
      %p121 = scmp.eq.s32.totalorder %s20, 0
      %p122 = por %p120, %p121
      %s124 = sadd.s32 %s123, 1
      %p127 = scmp.eq.s32.totalorder %s14, 3
      %p128 = scmp.ne.s32.totalorder %s123, %s125
      %p129 = scmp.eq.s32.totalorder %s14, 0
      %p130 = por %p128, %p129
      %p131 = scmp.ne.s32.totalorder %s123, %s125
      %p132 = scmp.eq.s32.totalorder %s19, 3
      %p133 = por %p131, %p132
      %p134 = scmp.ne.s32.totalorder %s125, %s126
      %p135 = scmp.eq.s32.totalorder %s19, 0
      %p136 = por %p134, %p135
      %p137 = scmp.ne.s32.totalorder %s125, %s126
      %p138 = scmp.eq.s32.totalorder %s20, 3
      %p139 = por %p137, %p138
      %p141 = scmp.ne.s32.totalorder %s126, %s140
      %p142 = scmp.eq.s32.totalorder %s20, 0
      %p143 = por %p141, %p142
      %s145 = sadd.s32 %s144, 1
      %p148 = scmp.eq.s32.totalorder %s14, 3
      %p149 = scmp.ne.s32.totalorder %s144, %s146
      %p150 = scmp.eq.s32.totalorder %s14, 0
      %p151 = por %p149, %p150
      %p152 = scmp.ne.s32.totalorder %s144, %s146
      %p153 = scmp.eq.s32.totalorder %s19, 3
      %p154 = por %p152, %p153
      %p155 = scmp.ne.s32.totalorder %s146, %s147
      %p156 = scmp.eq.s32.totalorder %s19, 0
      %p157 = por %p155, %p156
      %p158 = scmp.ne.s32.totalorder %s146, %s147
      %p159 = scmp.eq.s32.totalorder %s20, 3
      %p160 = por %p158, %p159
      %p162 = scmp.ne.s32.totalorder %s147, %s161
      %p163 = scmp.eq.s32.totalorder %s20, 0
      %p164 = por %p162, %p163
      %s166 = sadd.s32 %s165, 1
      %p169 = scmp.eq.s32.totalorder %s14, 3
      %p170 = scmp.ne.s32.totalorder %s165, %s167
      %p171 = scmp.eq.s32.totalorder %s14, 0
      %p172 = por %p170, %p171
      %p173 = scmp.ne.s32.totalorder %s165, %s167
      %p174 = scmp.eq.s32.totalorder %s19, 3
      %p175 = por %p173, %p174
      %p176 = scmp.ne.s32.totalorder %s167, %s168
      %p177 = scmp.eq.s32.totalorder %s19, 0
      %p178 = por %p176, %p177
      %p179 = scmp.ne.s32.totalorder %s167, %s168
      %p180 = scmp.eq.s32.totalorder %s20, 3
      %p181 = por %p179, %p180
      %p183 = scmp.ne.s32.totalorder %s168, %s182
      %p184 = scmp.eq.s32.totalorder %s20, 0
      %p185 = por %p183, %p184
      %p186 = scmp.le.s32.totalorder 1, %s14
      %p187 = scmp.lt.s32.totalorder %s14, 5
      %p188 = pnand %p186, %p187
      %p189 = pneg %p188
      // Predicated region
      $region9: #{tpu_custom_call.1} parent=5 // pred_check
        _
      $region10: #{tpu_custom_call.1} parent=5 // pred_check_branch
        %191 = sbr.rel (%p188) target = $region12
      $region11: #{tpu_custom_call.1} parent=5 // pred_region
        %s192 = ssub.s32 %s14, 1
        // Predicated region
        $region13: #{tpu_custom_call.1} parent=11 // pred_check
          %p193 = pneg %p47
        $region14: #{tpu_custom_call.1} parent=11 // pred_check_branch
          %195 = sbr.rel (%p193) target = $region16
        $region15: #{tpu_custom_call.1} parent=11 // pred_region
          _
        $region16: #{tpu_custom_call.1} parent=11 // pred_fallthru
          _
        // Predicated region
        $region17: #{tpu_custom_call.1} parent=11 // pred_check
          %p196 = pneg %p94
        $region18: #{tpu_custom_call.1} parent=11 // pred_check_branch
          %198 = sbr.rel (%p196) target = $region20
        $region19: #{tpu_custom_call.1} parent=11 // pred_region
          _
        $region20: #{tpu_custom_call.1} parent=11 // pred_fallthru
          _
        // Predicated region
        $region21: #{tpu_custom_call.1} parent=11 // pred_check
          %p199 = pneg %p115
        $region22: #{tpu_custom_call.1} parent=11 // pred_check_branch
          %201 = sbr.rel (%p199) target = $region24
        $region23: #{tpu_custom_call.1} parent=11 // pred_region
          _
        $region24: #{tpu_custom_call.1} parent=11 // pred_fallthru
          _
        // Predicated region
        $region25: #{tpu_custom_call.1} parent=11 // pred_check
          %p202 = pneg %p136
        $region26: #{tpu_custom_call.1} parent=11 // pred_check_branch
          %204 = sbr.rel (%p202) target = $region28
        $region27: #{tpu_custom_call.1} parent=11 // pred_region
          _
        $region28: #{tpu_custom_call.1} parent=11 // pred_fallthru
          _
        // Predicated region
        $region29: #{tpu_custom_call.1} parent=11 // pred_check
          %p205 = pneg %p157
        $region30: #{tpu_custom_call.1} parent=11 // pred_check_branch
          %207 = sbr.rel (%p205) target = $region32
        $region31: #{tpu_custom_call.1} parent=11 // pred_region
          %s209 = ssub.s32 6656, 6656
          %210 = vsyncadd [#allocation4], %s209
          %s211 = sshll.u32 [#allocation3], 4
          %s212 = int_to_ptr.vmem [resolvable:$true] %s211
          %217 = dma.hbm_to_vmem [thread:$0]  %s5, 6656, %s212, [#allocation4], 128, 128, 8
        $region32: #{tpu_custom_call.1} parent=11 // pred_fallthru
          _
      $region12: #{tpu_custom_call.1} parent=5 // pred_fallthru
        _
      %p218 = scmp.lt.s32.totalorder %s14, 4
      // Predicated region
      $region33: #{tpu_custom_call.1} parent=5 // pred_check
        %p219 = pneg %p218
      $region34: #{tpu_custom_call.1} parent=5 // pred_check_branch
        %221 = sbr.rel (%p219) target = $region36
      $region35: #{tpu_custom_call.1} parent=5 // pred_region
        // Predicated region
        $region37: #{tpu_custom_call.1} parent=35 // pred_check
          %p222 = pneg %p67
        $region38: #{tpu_custom_call.1} parent=35 // pred_check_branch
          %224 = sbr.rel (%p222) target = $region40
        $region39: #{tpu_custom_call.1} parent=35 // pred_region
          %p225 = scmp.lt.s32.totalorder %s22, 1
          %s226 = scalar_select %p225, %s22, 1
          %s227 = smul.addr %s226, 4
          %s228 = scalar_lea.vmem %s1, %s227
        $region40: #{tpu_custom_call.1} parent=35 // pred_fallthru
          _
      $region36: #{tpu_custom_call.1} parent=5 // pred_fallthru
        _
      %p229 = scmp.le.s32.totalorder 1, %s14
      %p230 = scmp.lt.s32.totalorder %s14, 5
      %p231 = pnand %p229, %p230
      %p232 = pneg %p231
      // Predicated region
      $region41: #{tpu_custom_call.1} parent=5 // pred_check
        _
      $region42: #{tpu_custom_call.1} parent=5 // pred_check_branch
        %234 = sbr.rel (%p231) target = $region44
      $region43: #{tpu_custom_call.1} parent=5 // pred_region
        %s235 = ssub.s32 %s14, 1
        // Predicated region
        $region45: #{tpu_custom_call.1} parent=43 // pred_check
          %p236 = pneg %p157
        $region46: #{tpu_custom_call.1} parent=43 // pred_check_branch
          %238 = sbr.rel (%p236) target = $region48
        $region47: #{tpu_custom_call.1} parent=43 // pred_region
          %239 = dma.done [#allocation4], 6656
        $region48: #{tpu_custom_call.1} parent=43 // pred_fallthru
          _
        %p240 = pneg %p47
        %p241 = pneg %p44
        %p242 = scmp.lt.s32.totalorder %s24, 1
        %s243 = scalar_select %p242, %s24, 1
        %s244 = smul.addr %s243, 4
        %s245 = scalar_lea.vmem %s1, %s244
        %p246 = pneg %p73
        %p247 = pneg %p70
        %p248 = pneg %p94
        %p249 = pneg %p91
        %p250 = pneg %p115
        %p251 = pneg %p112
        %p252 = pneg %p136
        %p253 = pneg %p133
        %p254 = pneg %p157
        %p255 = pneg %p154
        %p256 = pneg %p178
        %p257 = pneg %p175
        %p258 = scmp.lt.s32.totalorder %s24, 1
        %s259 = scalar_select %p258, %s24, 1
        %s260 = smul.addr %s259, 4
        %s261 = scalar_lea.vmem %s1, %s260
        %p263 = scmp.eq.s32.totalorder %s23, 0
        %p264 = scmp.eq.s32.totalorder %s24, 0
        %p265 = pnand %p263, %p264
        %p266 = pneg %p265
        // Predicated region
        $region49: #{tpu_custom_call.1} parent=43 // pred_check
          _
        $region50: #{tpu_custom_call.1} parent=43 // pred_check_branch
          %268 = sbr.rel (%p265) target = $region52
        $region51: #{tpu_custom_call.1} parent=43 // pred_region
          %v269 = vld [vmem:[%s0] sm:$0xff]
          %v270 = vld [vmem:[%s0 + $0x8] sm:$0xff]
          %v271 = vld [vmem:[#allocation3] sm:$0xff]
          %v272 = vld [vmem:[#allocation3 + $0x8] sm:$0x1]
          %v273 = vlaneseq
          %v274 = vshrl.u32 %v273, 7
          %v275 = vsub.s32 0, %v274
          %v276 = vrot.slane %v272, %v275
          %vm277 = vcmask 64512
          %v279 = vsel %vm277, %v269, 0
          %v282 = vsel %vm277, %v270, 0
          %284 = vmatprep.subr.mxu0 0.0
          %285 = vmatpush1.msra.mxu0 0.0
          %286 = vmatprep.subr.mxu0 0.0
          %287 = vmatpush1.msra.mxu0 0.0
          %288 = vmatprep.subr.mxu0 0.0
          %289 = vmatpush1.msra.mxu0 0.0
          %290 = vmatprep.subr.mxu0 0.0
          %291 = vmatpush1.msra.mxu0 0.0
          %292 = vmatprep.subr.mxu0 0.0
          %293 = vmatpush1.msra.mxu0 0.0
          %294 = vmatprep.subr.mxu0 0.0
          %295 = vmatpush1.msra.mxu0 0.0
          %296 = vmatprep.subr.mxu0 0.0
          %297 = vmatpush1.msra.mxu0 0.0
          %298 = vmatprep.subr.mxu0 0.0
          %299 = vmatpush1.msra.mxu0 0.0
          %300 = vmatprep.subr.mxu0 0.0
          %301 = vmatpush1.msra.mxu0 0.0
          %302 = vmatprep.subr.mxu0 0.0
          %303 = vmatpush1.msra.mxu0 0.0
          %304 = vmatprep.subr.mxu0 0.0
          %305 = vmatpush1.msra.mxu0 0.0
          %306 = vmatprep.subr.mxu0 0.0
          %307 = vmatpush1.msra.mxu0 0.0
          %308 = vmatprep.subr.mxu0 0.0
          %309 = vmatpush1.msra.mxu0 0.0
          %310 = vmatprep.subr.mxu0 0.0
          %311 = vmatpush1.msra.mxu0 0.0
          %312 = vmatprep.subr.mxu0 0.0
          %313 = vmatpush1.msra.mxu0 0.0
          %314 = vmatprep.subr.mxu0 0.0
          %315 = vmatpush1.msra.mxu0 %v271
          %316 = vmatprep.subr.mxu0 0.0
          %317 = vmatpush2.msra.mxu0 0.0
          %318 = vmatprep.subr.mxu0 0.0
          %319 = vmatpush2.msra.mxu0 0.0
          %320 = vmatprep.subr.mxu0 0.0
          %321 = vmatpush2.msra.mxu0 0.0
          %322 = vmatprep.subr.mxu0 0.0
          %323 = vmatpush2.msra.mxu0 0.0
          %324 = vmatprep.subr.mxu0 0.0
          %325 = vmatpush2.msra.mxu0 0.0
          %326 = vmatprep.subr.mxu0 0.0
          %327 = vmatpush2.msra.mxu0 0.0
          %328 = vmatprep.subr.mxu0 0.0
          %329 = vmatpush2.msra.mxu0 0.0
          %330 = vmatprep.subr.mxu0 0.0
          %331 = vmatpush2.msra.mxu0 0.0
          %332 = vmatprep.subr.mxu0 0.0
          %333 = vmatpush2.msra.mxu0 0.0
          %334 = vmatprep.subr.mxu0 0.0
          %335 = vmatpush2.msra.mxu0 0.0
          %336 = vmatprep.subr.mxu0 0.0
          %337 = vmatpush2.msra.mxu0 0.0
          %338 = vmatprep.subr.mxu0 0.0
          %339 = vmatpush2.msra.mxu0 0.0
          %340 = vmatprep.subr.mxu0 0.0
          %341 = vmatpush2.msra.mxu0 0.0
          %342 = vmatprep.subr.mxu0 0.0
          %343 = vmatpush2.msra.mxu0 0.0
          %344 = vmatprep.subr.mxu0 0.0
          %345 = vmatpush2.msra.mxu0 0.0
          %346 = vmatprep.subr.mxu0 0.0
          %347 = vmatpush2.msra.mxu0 0.0
          %348 = vmatprep.mubr.f32.mxu0 0.0
          %349 = vmatmul.mubr.f32.gmra.mxu0 %v279
          %v350 = vpop.f32.mrf.mxu0
          %v351 = vadd.f32 %v276, %v350
          %v352 = vpop.f32.mrf.mxu0
          %353 = vmatprep.mubr.f32.mxu0 0.0
          %354 = vmatmul.mubr.f32.gmra.mxu0 %v282
          %v355 = vpop.f32.mrf.mxu0
          %v356 = vadd.f32 %v276, %v355
          %v357 = vpop.f32.mrf.mxu0
          %358 = vdwg.mxu0
          %v359 = vmax.f32 %v351, 0.0
          %v360 = vmax.f32 %v356, 0.0
          %v361 = vld [vmem:[%s2] sm:$0xff]
          %v362 = vld [vmem:[%s2 + $0x8] sm:$0xff]
          %v363 = vld [vmem:[#allocation3 + $0x10] sm:$0xff]
          %v364 = vld [vmem:[#allocation3 + $0x18] sm:$0xff]
          %v365 = vld [vmem:[#allocation3 + $0x20] sm:$0xff]
          %v366 = vld [vmem:[#allocation3 + $0x28] sm:$0xff]
          %v367 = vld [vmem:[#allocation3 + $0x30] sm:$0xff]
          %v368 = vld [vmem:[#allocation3 + $0x38] sm:$0xff]
          %v369 = vld [vmem:[#allocation3 + $0x40] sm:$0xff]
          %v370 = vld [vmem:[#allocation3 + $0x48] sm:$0xff]
          %v371 = vld [vmem:[#allocation3 + $0x50] sm:$0xff]
          %v372 = vld [vmem:[#allocation3 + $0x58] sm:$0xff]
          %v373 = vld [vmem:[#allocation3 + $0x60] sm:$0xff]
          %v374 = vld [vmem:[#allocation3 + $0x68] sm:$0xff]
          %v375 = vld [vmem:[#allocation3 + $0x70] sm:$0xff]
          %v376 = vld [vmem:[#allocation3 + $0x78] sm:$0xff]
          %v377 = vld [vmem:[#allocation3 + $0x80] sm:$0xff]
          %v378 = vld [vmem:[#allocation3 + $0x88] sm:$0xff]
          %379 = vmatprep.subr.mxu0 0.0
          %380 = vmatpush1.msra.mxu0 %v378
          %381 = vmatprep.subr.mxu0 0.0
          %382 = vmatpush1.msra.mxu0 %v377
          %383 = vmatprep.subr.mxu0 0.0
          %384 = vmatpush1.msra.mxu0 %v376
          %385 = vmatprep.subr.mxu0 0.0
          %386 = vmatpush1.msra.mxu0 %v375
          %387 = vmatprep.subr.mxu0 0.0
          %388 = vmatpush1.msra.mxu0 %v374
          %389 = vmatprep.subr.mxu0 0.0
          %390 = vmatpush1.msra.mxu0 %v373
          %391 = vmatprep.subr.mxu0 0.0
          %392 = vmatpush1.msra.mxu0 %v372
          %393 = vmatprep.subr.mxu0 0.0
          %394 = vmatpush1.msra.mxu0 %v371
          %395 = vmatprep.subr.mxu0 0.0
          %396 = vmatpush1.msra.mxu0 %v370
          %397 = vmatprep.subr.mxu0 0.0
          %398 = vmatpush1.msra.mxu0 %v369
          %399 = vmatprep.subr.mxu0 0.0
          %400 = vmatpush1.msra.mxu0 %v368
          %401 = vmatprep.subr.mxu0 0.0
          %402 = vmatpush1.msra.mxu0 %v367
          %403 = vmatprep.subr.mxu0 0.0
          %404 = vmatpush1.msra.mxu0 %v366
          %405 = vmatprep.subr.mxu0 0.0
          %406 = vmatpush1.msra.mxu0 %v365
          %407 = vmatprep.subr.mxu0 0.0
          %408 = vmatpush1.msra.mxu0 %v364
          %409 = vmatprep.subr.mxu0 0.0
          %410 = vmatpush1.msra.mxu0 %v363
          %411 = vmatprep.subr.mxu0 0.0
          %412 = vmatpush2.msra.mxu0 0.0
          %413 = vmatprep.subr.mxu0 0.0
          %414 = vmatpush2.msra.mxu0 0.0
          %415 = vmatprep.subr.mxu0 0.0
          %416 = vmatpush2.msra.mxu0 0.0
          %417 = vmatprep.subr.mxu0 0.0
          %418 = vmatpush2.msra.mxu0 0.0
          %419 = vmatprep.subr.mxu0 0.0
          %420 = vmatpush2.msra.mxu0 0.0
          %421 = vmatprep.subr.mxu0 0.0
          %422 = vmatpush2.msra.mxu0 0.0
          %423 = vmatprep.subr.mxu0 0.0
          %424 = vmatpush2.msra.mxu0 0.0
          %425 = vmatprep.subr.mxu0 0.0
          %426 = vmatpush2.msra.mxu0 0.0
          %427 = vmatprep.subr.mxu0 0.0
          %428 = vmatpush2.msra.mxu0 0.0
          %429 = vmatprep.subr.mxu0 0.0
          %430 = vmatpush2.msra.mxu0 0.0
          %431 = vmatprep.subr.mxu0 0.0
          %432 = vmatpush2.msra.mxu0 0.0
          %433 = vmatprep.subr.mxu0 0.0
          %434 = vmatpush2.msra.mxu0 0.0
          %435 = vmatprep.subr.mxu0 0.0
          %436 = vmatpush2.msra.mxu0 0.0
          %437 = vmatprep.subr.mxu0 0.0
          %438 = vmatpush2.msra.mxu0 0.0
          %439 = vmatprep.subr.mxu0 0.0
          %440 = vmatpush2.msra.mxu0 0.0
          %441 = vmatprep.subr.mxu0 0.0
          %442 = vmatpush2.msra.mxu0 0.0
          %443 = vmatprep.mubr.f32.mxu0 0.0
          %444 = vmatmul.mubr.f32.gmra.mxu0 %v359
          %v445 = vpop.f32.mrf.mxu0
          %v446 = vadd.f32 0.0, %v445
          %v447 = vpop.f32.mrf.mxu0
          %448 = vmatprep.mubr.f32.mxu0 0.0
          %449 = vmatmul.mubr.f32.gmra.mxu0 %v360
          %v450 = vpop.f32.mrf.mxu0
          %v451 = vadd.f32 0.0, %v450
          %v452 = vpop.f32.mrf.mxu0
          %453 = vdwg.mxu0
          %455 = vset.pattern.permute.xlu0 0
          %456 = vperm.xlu0 %455, %v361
          %v457 = vpop.permute.xlu0 %456
          %460 = vset.pattern.permute.xlu0 0
          %461 = vperm.xlu0 %460, %v362
          %v462 = vpop.permute.xlu0 %461
          %v464 = vmul.f32 %v457, %v446
          %v465 = vmul.f32 %v462, %v451
          %v466 = vpack.c.bf16 %v465, %v464
          %v468 = vunpack.c.l.b16 %v466
          %v469 = vunpack.c.h.b16 %v466
          %v470 = vpack.c.b16 %v468, %v468
          %v471 = vpack.c.b16 %v469, %v469
          %474 = vst [vmem:[#allocation2] sm:$0xf] %v470
          %475 = vst [vmem:[#allocation2 + $0x4] sm:$0xf] %v471
        $region52: #{tpu_custom_call.1} parent=43 // pred_fallthru
          _
        %s476 = smul.u32 %s24, 8
        %s477 = scalar_lea.vmem %s2, %s476
        %v478 = vld [vmem:[%s477] sm:$0xff]
        %v479 = vld [vmem:[%s261] sm:$0xf]
        %s480 = smul.u32 %s23, 2
        %s481 = smul.addr %s480, 4
        %s482 = scalar_lea.vmem [#allocation2], %s481
        %v483 = vld [vmem:[%s482] sm:$0xf]
        %v484 = vld [vmem:[%s482 + $0x4] sm:$0xf]
        %v487 = vunpack.c.l.b16 %v483
        %v488 = vunpack.c.l.b16 %v484
        %v489 = vpack.c.b16 %v488, %v487
        %vm491 = vcmask 130048
        %v493 = vsel %vm491, %v479, 0
        %495 = vmatprep.subr.bf16.mxu0 0
        %496 = vmatpush1.bf16.msra.mxu0 0
        %497 = vmatprep.subr.bf16.mxu0 0
        %498 = vmatpush1.bf16.msra.mxu0 0
        %499 = vmatprep.subr.bf16.mxu0 0
        %500 = vmatpush1.bf16.msra.mxu0 0
        %501 = vmatprep.subr.bf16.mxu0 0
        %502 = vmatpush1.bf16.msra.mxu0 0
        %503 = vmatprep.subr.bf16.mxu0 0
        %504 = vmatpush1.bf16.msra.mxu0 0
        %505 = vmatprep.subr.bf16.mxu0 0
        %506 = vmatpush1.bf16.msra.mxu0 0
        %507 = vmatprep.subr.bf16.mxu0 0
        %508 = vmatpush1.bf16.msra.mxu0 0
        %509 = vmatprep.subr.bf16.mxu0 0
        %510 = vmatpush1.bf16.msra.mxu0 %v489
        %511 = vmatprep.subr.bf16.mxu0 0
        %512 = vmatpush2.bf16.msra.mxu0 0
        %513 = vmatprep.subr.bf16.mxu0 0
        %514 = vmatpush2.bf16.msra.mxu0 0
        %515 = vmatprep.subr.bf16.mxu0 0
        %516 = vmatpush2.bf16.msra.mxu0 0
        %517 = vmatprep.subr.bf16.mxu0 0
        %518 = vmatpush2.bf16.msra.mxu0 0
        %519 = vmatprep.subr.bf16.mxu0 0
        %520 = vmatpush2.bf16.msra.mxu0 0
        %521 = vmatprep.subr.bf16.mxu0 0
        %522 = vmatpush2.bf16.msra.mxu0 0
        %523 = vmatprep.subr.bf16.mxu0 0
        %524 = vmatpush2.bf16.msra.mxu0 0
        %525 = vmatprep.subr.bf16.mxu0 0
        %526 = vmatpush2.bf16.msra.mxu0 0
        %527 = vmatprep.mubr.bf16.mxu0 0
        %528 = vmatmul.mubr.bf16.gmra.mxu0 %v493
        %v529 = vpop.f32.mrf.mxu0
        %v530 = vadd.f32 0.0, %v529
        %v531 = vpop.f32.mrf.mxu0
        %v532 = vpop.f32.mrf.mxu0
        %v533 = vpop.f32.mrf.mxu0
        %534 = vdwg.mxu0
        %v535 = vld [vmem:[#allocation3 + $0x90] sm:$0x1]
        %v536 = vld [vmem:[#allocation3 + $0x118] sm:$0x1]
        %s537 = scalar_select %p263, 1, 0
        %v538 = vstv %s537
        %vm539 = vcmp.eq.s32.totalorder %v538, 1
        %v540 = vsel %vm539, %v535, %v536
        %542 = vset.pattern.permute.xlu0 0
        %543 = vperm.xlu0 %542, %v478
        %v544 = vpop.permute.xlu0 %543
        %v546 = vmul.f32 %v544, %v530
        %v547 = vlaneseq
        %v548 = vshrl.u32 %v547, 7
        %v549 = vsub.s32 0, %v548
        %v550 = vrot.slane %v540, %v549
        %v551 = vadd.f32 %v546, %v550
        %v552 = vmax.f32 %v551, 0.0
        // Predicated region
        $region53: #{tpu_custom_call.1} parent=43 // pred_check
          %p553 = pneg %p263
        $region54: #{tpu_custom_call.1} parent=43 // pred_check_branch
          %555 = sbr.rel (%p553) target = $region56
        $region55: #{tpu_custom_call.1} parent=43 // pred_region
          %v556 = vld [vmem:[#allocation3 + $0x98] sm:$0xff]
          %v557 = vld [vmem:[#allocation3 + $0xa0] sm:$0xff]
          %v558 = vld [vmem:[#allocation3 + $0xa8] sm:$0xff]
          %v559 = vld [vmem:[#allocation3 + $0xb0] sm:$0xff]
          %v560 = vld [vmem:[#allocation3 + $0xb8] sm:$0xff]
          %v561 = vld [vmem:[#allocation3 + $0xc0] sm:$0xff]
          %v562 = vld [vmem:[#allocation3 + $0xc8] sm:$0xff]
          %v563 = vld [vmem:[#allocation3 + $0xd0] sm:$0xff]
          %v564 = vld [vmem:[#allocation3 + $0xd8] sm:$0xff]
          %v565 = vld [vmem:[#allocation3 + $0xe0] sm:$0xff]
          %v566 = vld [vmem:[#allocation3 + $0xe8] sm:$0xff]
          %v567 = vld [vmem:[#allocation3 + $0xf0] sm:$0xff]
          %v568 = vld [vmem:[#allocation3 + $0xf8] sm:$0xff]
          %v569 = vld [vmem:[#allocation3 + $0x100] sm:$0xff]
          %v570 = vld [vmem:[#allocation3 + $0x108] sm:$0xff]
          %v571 = vld [vmem:[#allocation3 + $0x110] sm:$0xff]
          %572 = vmatprep.subr.mxu0 0.0
          %573 = vmatpush1.msra.mxu0 %v571
          %574 = vmatprep.subr.mxu0 0.0
          %575 = vmatpush1.msra.mxu0 %v570
          %576 = vmatprep.subr.mxu0 0.0
          %577 = vmatpush1.msra.mxu0 %v569
          %578 = vmatprep.subr.mxu0 0.0
          %579 = vmatpush1.msra.mxu0 %v568
          %580 = vmatprep.subr.mxu0 0.0
          %581 = vmatpush1.msra.mxu0 %v567
          %582 = vmatprep.subr.mxu0 0.0
          %583 = vmatpush1.msra.mxu0 %v566
          %584 = vmatprep.subr.mxu0 0.0
          %585 = vmatpush1.msra.mxu0 %v565
          %586 = vmatprep.subr.mxu0 0.0
          %587 = vmatpush1.msra.mxu0 %v564
          %588 = vmatprep.subr.mxu0 0.0
          %589 = vmatpush1.msra.mxu0 %v563
          %590 = vmatprep.subr.mxu0 0.0
          %591 = vmatpush1.msra.mxu0 %v562
          %592 = vmatprep.subr.mxu0 0.0
          %593 = vmatpush1.msra.mxu0 %v561
          %594 = vmatprep.subr.mxu0 0.0
          %595 = vmatpush1.msra.mxu0 %v560
          %596 = vmatprep.subr.mxu0 0.0
          %597 = vmatpush1.msra.mxu0 %v559
          %598 = vmatprep.subr.mxu0 0.0
          %599 = vmatpush1.msra.mxu0 %v558
          %600 = vmatprep.subr.mxu0 0.0
          %601 = vmatpush1.msra.mxu0 %v557
          %602 = vmatprep.subr.mxu0 0.0
          %603 = vmatpush1.msra.mxu0 %v556
          %604 = vmatprep.subr.mxu0 0.0
          %605 = vmatpush2.msra.mxu0 0.0
          %606 = vmatprep.subr.mxu0 0.0
          %607 = vmatpush2.msra.mxu0 0.0
          %608 = vmatprep.subr.mxu0 0.0
          %609 = vmatpush2.msra.mxu0 0.0
          %610 = vmatprep.subr.mxu0 0.0
          %611 = vmatpush2.msra.mxu0 0.0
          %612 = vmatprep.subr.mxu0 0.0
          %613 = vmatpush2.msra.mxu0 0.0
          %614 = vmatprep.subr.mxu0 0.0
          %615 = vmatpush2.msra.mxu0 0.0
          %616 = vmatprep.subr.mxu0 0.0
          %617 = vmatpush2.msra.mxu0 0.0
          %618 = vmatprep.subr.mxu0 0.0
          %619 = vmatpush2.msra.mxu0 0.0
          %620 = vmatprep.subr.mxu0 0.0
          %621 = vmatpush2.msra.mxu0 0.0
          %622 = vmatprep.subr.mxu0 0.0
          %623 = vmatpush2.msra.mxu0 0.0
          %624 = vmatprep.subr.mxu0 0.0
          %625 = vmatpush2.msra.mxu0 0.0
          %626 = vmatprep.subr.mxu0 0.0
          %627 = vmatpush2.msra.mxu0 0.0
          %628 = vmatprep.subr.mxu0 0.0
          %629 = vmatpush2.msra.mxu0 0.0
          %630 = vmatprep.subr.mxu0 0.0
          %631 = vmatpush2.msra.mxu0 0.0
          %632 = vmatprep.subr.mxu0 0.0
          %633 = vmatpush2.msra.mxu0 0.0
          %634 = vmatprep.subr.mxu0 0.0
          %635 = vmatpush2.msra.mxu0 0.0
          %636 = vmatprep.mubr.f32.mxu0 0.0
          %637 = vmatmul.mubr.f32.gmra.mxu0 %v552
          %v638 = vpop.f32.mrf.mxu0
          %v639 = vadd.f32 0.0, %v638
          %v640 = vpop.f32.mrf.mxu0
          %641 = vdwg.mxu0
          %v642 = vmul.f32 %v544, %v639
          %v643 = vpack.c.bf16 %v642, %v642
          %s644 = sshra.s32 %s476, 3
          %s645 = sand.u32 %s476, 7
          %s646 = sadd.s32 %s644, 2
          %s647 = smul.addr %s646, 4
          %s648 = scalar_lea.vmem [#allocation2], %s647
          %649 = vst [vmem:[%s648] sm:$0xf] %v643
        $region56: #{tpu_custom_call.1} parent=43 // pred_fallthru
          _
        %p650 = scmp.eq.s32.totalorder %s23, 1
        // Predicated region
        $region57: #{tpu_custom_call.1} parent=43 // pred_check
          %p651 = pneg %p650
        $region58: #{tpu_custom_call.1} parent=43 // pred_check_branch
          %653 = sbr.rel (%p651) target = $region60
        $region59: #{tpu_custom_call.1} parent=43 // pred_region
          %v654 = vpack.c.bf16 %v552, %v552
          %s655 = sshra.s32 %s476, 3
          %s656 = sand.u32 %s476, 7
          %s657 = smul.addr %s655, 4
          %s658 = scalar_lea.vmem [#allocation2], %s657
          %659 = vst [vmem:[%s658] sm:$0xf] %v654
        $region60: #{tpu_custom_call.1} parent=43 // pred_fallthru
          _
        %p660 = scmp.eq.s32.totalorder %s24, 1
        %p661 = pnand %p650, %p660
        %p662 = pneg %p661
        // Predicated region
        $region61: #{tpu_custom_call.1} parent=43 // pred_check
          _
        $region62: #{tpu_custom_call.1} parent=43 // pred_check_branch
          %664 = sbr.rel (%p661) target = $region64
        $region63: #{tpu_custom_call.1} parent=43 // pred_region
          %v665 = vld [vmem:[%s3] sm:$0x3]
          %v666 = vld [vmem:[#allocation2] sm:$0xf]
          %v667 = vld [vmem:[#allocation2 + $0x4] sm:$0xf]
          %v668 = vunpack.c.l.bf16 %v666
          %v669 = vunpack.c.l.bf16 %v667
          %v671 = vsel %vm491, %v665, 0
          %673 = vmatprep.subr.mxu0 0.0
          %674 = vmatpush1.msra.mxu0 0.0
          %675 = vmatprep.subr.mxu0 0.0
          %676 = vmatpush1.msra.mxu0 0.0
          %677 = vmatprep.subr.mxu0 0.0
          %678 = vmatpush1.msra.mxu0 0.0
          %679 = vmatprep.subr.mxu0 0.0
          %680 = vmatpush1.msra.mxu0 0.0
          %681 = vmatprep.subr.mxu0 0.0
          %682 = vmatpush1.msra.mxu0 0.0
          %683 = vmatprep.subr.mxu0 0.0
          %684 = vmatpush1.msra.mxu0 0.0
          %685 = vmatprep.subr.mxu0 0.0
          %686 = vmatpush1.msra.mxu0 0.0
          %687 = vmatprep.subr.mxu0 0.0
          %688 = vmatpush1.msra.mxu0 0.0
          %689 = vmatprep.subr.mxu0 0.0
          %690 = vmatpush1.msra.mxu0 0.0
          %691 = vmatprep.subr.mxu0 0.0
          %692 = vmatpush1.msra.mxu0 0.0
          %693 = vmatprep.subr.mxu0 0.0
          %694 = vmatpush1.msra.mxu0 0.0
          %695 = vmatprep.subr.mxu0 0.0
          %696 = vmatpush1.msra.mxu0 0.0
          %697 = vmatprep.subr.mxu0 0.0
          %698 = vmatpush1.msra.mxu0 0.0
          %699 = vmatprep.subr.mxu0 0.0
          %700 = vmatpush1.msra.mxu0 0.0
          %701 = vmatprep.subr.mxu0 0.0
          %702 = vmatpush1.msra.mxu0 %v669
          %703 = vmatprep.subr.mxu0 0.0
          %704 = vmatpush1.msra.mxu0 %v668
          %705 = vmatprep.subr.mxu0 0.0
          %706 = vmatpush2.msra.mxu0 0.0
          %707 = vmatprep.subr.mxu0 0.0
          %708 = vmatpush2.msra.mxu0 0.0
          %709 = vmatprep.subr.mxu0 0.0
          %710 = vmatpush2.msra.mxu0 0.0
          %711 = vmatprep.subr.mxu0 0.0
          %712 = vmatpush2.msra.mxu0 0.0
          %713 = vmatprep.subr.mxu0 0.0
          %714 = vmatpush2.msra.mxu0 0.0
          %715 = vmatprep.subr.mxu0 0.0
          %716 = vmatpush2.msra.mxu0 0.0
          %717 = vmatprep.subr.mxu0 0.0
          %718 = vmatpush2.msra.mxu0 0.0
          %719 = vmatprep.subr.mxu0 0.0
          %720 = vmatpush2.msra.mxu0 0.0
          %721 = vmatprep.subr.mxu0 0.0
          %722 = vmatpush2.msra.mxu0 0.0
          %723 = vmatprep.subr.mxu0 0.0
          %724 = vmatpush2.msra.mxu0 0.0
          %725 = vmatprep.subr.mxu0 0.0
          %726 = vmatpush2.msra.mxu0 0.0
          %727 = vmatprep.subr.mxu0 0.0
          %728 = vmatpush2.msra.mxu0 0.0
          %729 = vmatprep.subr.mxu0 0.0
          %730 = vmatpush2.msra.mxu0 0.0
          %731 = vmatprep.subr.mxu0 0.0
          %732 = vmatpush2.msra.mxu0 0.0
          %733 = vmatprep.subr.mxu0 0.0
          %734 = vmatpush2.msra.mxu0 0.0
          %735 = vmatprep.subr.mxu0 0.0
          %736 = vmatpush2.msra.mxu0 0.0
          %737 = vmatprep.mubr.f32.mxu0 0.0
          %738 = vmatmul.mubr.f32.gmra.mxu0 %v671
          %v739 = vpop.f32.mrf.mxu0
          %v740 = vadd.f32 0.0, %v739
          %v741 = vpop.f32.mrf.mxu0
          %742 = vdwg.mxu0
          %v743 = vld [vmem:[%s4] sm:$0x3]
          %v744 = vld [vmem:[#allocation3 + $0x120] sm:$0x1]
          %746 = vset.pattern.permute.xlu0 20
          %747 = vperm.xlu0 %746, %v743
          %v748 = vpop.permute.xlu0 %747
          %v750 = vlaneseq
          %v751 = vshrl.u32 %v750, 7
          %v752 = vsub.s32 0, %v751
          %v753 = vrot.slane %v744, %v752
          %v754 = vmul.f32 %v748, %v753
          %v755 = vld [vmem:[#allocation3 + $0x128] sm:$0x1]
          %v756 = vlaneseq
          %v757 = vshrl.u32 %v756, 7
          %v758 = vsub.s32 0, %v757
          %v759 = vrot.slane %v755, %v758
          %v760 = vadd.f32 %v754, %v759
          %v761 = vmax.f32 %v760, 0.0
          %v762 = vld [vmem:[#allocation3 + $0x130] sm:$0xff]
          %v763 = vld [vmem:[#allocation3 + $0x138] sm:$0xff]
          %v764 = vld [vmem:[#allocation3 + $0x140] sm:$0xf]
          %v765 = vlaneseq
          %v766 = vshrl.u32 %v765, 7
          %v767 = vsub.s32 0, %v766
          %v768 = vrot.slane %v743, %v767
          %770 = vbcast.lane.b32.xlu0 %v768, 256
          %v771 = vpop.permute.xlu0 %770
          %s773 = sor.u32 256, 8
          %774 = vbcast.lane.b32.xlu0 %v768, %s773
          %v775 = vpop.permute.xlu0 %774
          %s777 = sor.u32 256, 16
          %778 = vbcast.lane.b32.xlu0 %v768, %s777
          %v779 = vpop.permute.xlu0 %778
          %v780 = vlaneseq
          %v781 = vshrl.u32 %v780, 7
          %v782 = vsub.s32 1, %v781
          %v783 = vrot.slane %v743, %v782
          %785 = vbcast.lane.b32.xlu0 %v783, 256
          %v786 = vpop.permute.xlu0 %785
          %s788 = sor.u32 256, 8
          %789 = vbcast.lane.b32.xlu0 %v783, %s788
          %v790 = vpop.permute.xlu0 %789
          %s792 = sor.u32 256, 16
          %793 = vbcast.lane.b32.xlu0 %v783, %s792
          %v794 = vpop.permute.xlu0 %793
          %v795 = vmul.f32 %v771, %v762
          %v796 = vmul.f32 %v775, %v763
          %v797 = vmul.f32 %v779, %v764
          %v798 = vmul.f32 %v786, %v762
          %v799 = vmul.f32 %v790, %v763
          %v800 = vmul.f32 %v794, %v764
          %vm801 = vcmask 80896
          %v802 = vsel %vm801, %v795, 0.0
          %v803 = vsel %vm801, %v796, 0.0
          %v804 = vadd.f32 %v802, %v803
          %vm805 = vcmask 76800
          %v806 = vsel %vm805, %v797, 0.0
          %v807 = vadd.f32 %v804, %v806
          %v808 = vrot.slane %v807, 4
          %v809 = vadd.f32 %v807, %v808
          %v810 = vrot.slane %v809, 2
          %v811 = vadd.f32 %v809, %v810
          %v812 = vrot.slane %v811, 1
          %v813 = vadd.f32 %v811, %v812
          %v814 = vsel %vm801, %v798, 0.0
          %v815 = vsel %vm801, %v799, 0.0
          %v816 = vadd.f32 %v814, %v815
          %v817 = vsel %vm805, %v800, 0.0
          %v818 = vadd.f32 %v816, %v817
          %v819 = vrot.slane %v818, 4
          %v820 = vadd.f32 %v818, %v819
          %v821 = vrot.slane %v820, 2
          %v822 = vadd.f32 %v820, %v821
          %v823 = vrot.slane %v822, 1
          %v824 = vadd.f32 %v822, %v823
          %v825 = vld [vmem:[#allocation3 + $0x148] sm:$0x1]
          %v826 = vlaneseq
          %v827 = vshrl.u32 %v826, 7
          %v828 = vsub.s32 0, %v827
          %v829 = vrot.slane %v825, %v828
          %v830 = vadd.f32 %v813, %v829
          %v831 = vadd.f32 %v824, %v829
          %v832 = vmax.f32 %v830, 0.0
          %v833 = vmax.f32 %v831, 0.0
          %v834 = vld [vmem:[#allocation3 + $0x150] sm:$0xff]
          %v835 = vld [vmem:[#allocation3 + $0x158] sm:$0x3]
          %v836 = vlaneseq
          %v837 = vshrl.u32 %v836, 7
          %v838 = vsub.s32 0, %v837
          %v839 = vrot.slane %v832, %v838
          %841 = vbcast.lane.b32.xlu0 %v839, 256
          %v842 = vpop.permute.xlu0 %841
          %s844 = sor.u32 256, 8
          %845 = vbcast.lane.b32.xlu0 %v839, %s844
          %v846 = vpop.permute.xlu0 %845
          %v847 = vlaneseq
          %v848 = vshrl.u32 %v847, 7
          %v849 = vsub.s32 0, %v848
          %v850 = vrot.slane %v833, %v849
          %852 = vbcast.lane.b32.xlu0 %v850, 256
          %v853 = vpop.permute.xlu0 %852
          %s855 = sor.u32 256, 8
          %856 = vbcast.lane.b32.xlu0 %v850, %s855
          %v857 = vpop.permute.xlu0 %856
          %v858 = vmul.f32 %v842, %v834
          %v859 = vmul.f32 %v846, %v835
          %v860 = vmul.f32 %v853, %v834
          %v861 = vmul.f32 %v857, %v835
          %vm862 = vcmask 31744
          %v863 = vsel %vm862, %v858, 0.0
          %vm864 = vcmask 25600
          %v865 = vsel %vm864, %v859, 0.0
          %v866 = vadd.f32 %v863, %v865
          %v867 = vrot.slane %v866, 4
          %v868 = vadd.f32 %v866, %v867
          %v869 = vrot.slane %v868, 2
          %v870 = vadd.f32 %v868, %v869
          %v871 = vrot.slane %v870, 1
          %v872 = vadd.f32 %v870, %v871
          %v873 = vsel %vm862, %v860, 0.0
          %v874 = vsel %vm864, %v861, 0.0
          %v875 = vadd.f32 %v873, %v874
          %v876 = vrot.slane %v875, 4
          %v877 = vadd.f32 %v875, %v876
          %v878 = vrot.slane %v877, 2
          %v879 = vadd.f32 %v877, %v878
          %v880 = vrot.slane %v879, 1
          %v881 = vadd.f32 %v879, %v880
          %v882 = vld [vmem:[#allocation3 + $0x160] sm:$0x1]
          %v883 = vlaneseq
          %v884 = vshrl.u32 %v883, 7
          %v885 = vsub.s32 0, %v884
          %v886 = vrot.slane %v882, %v885
          %v887 = vadd.f32 %v872, %v886
          %v888 = vadd.f32 %v881, %v886
          %890 = vrot.lane.b32.xlu0 %v761, 16
          %v891 = vpop.permute.xlu0 %890
          %v895 = vrot.slane %v888, 7
          %vm896 = vcmask 1041409
          %v897 = vsel %vm896, %v895, %v887
          %898 = vrot.lane.b32.xlu0 %v897, 20
          %v899 = vpop.permute.xlu0 %898
          %v901 = vsel %vm491, %v740, %v891
          %vm902 = vcmask 162816
          %v903 = vsel %vm902, %v901, %v899
          %v904 = vld [vmem:[#allocation3 + $0x168] sm:$0xff]
          %v905 = vld [vmem:[#allocation3 + $0x170] sm:$0xff]
          %v906 = vld [vmem:[#allocation3 + $0x178] sm:$0xff]
          %v907 = vlaneseq
          %v908 = vshrl.u32 %v907, 7
          %v909 = vsub.s32 0, %v908
          %v910 = vrot.slane %v903, %v909
          %912 = vbcast.lane.b32.xlu0 %v910, 256
          %v913 = vpop.permute.xlu0 %912
          %s915 = sor.u32 256, 8
          %916 = vbcast.lane.b32.xlu0 %v910, %s915
          %v917 = vpop.permute.xlu0 %916
          %s919 = sor.u32 256, 16
          %920 = vbcast.lane.b32.xlu0 %v910, %s919
          %v921 = vpop.permute.xlu0 %920
          %v922 = vlaneseq
          %v923 = vshrl.u32 %v922, 7
          %v924 = vsub.s32 1, %v923
          %v925 = vrot.slane %v903, %v924
          %927 = vbcast.lane.b32.xlu0 %v925, 256
          %v928 = vpop.permute.xlu0 %927
          %s930 = sor.u32 256, 8
          %931 = vbcast.lane.b32.xlu0 %v925, %s930
          %v932 = vpop.permute.xlu0 %931
          %s934 = sor.u32 256, 16
          %935 = vbcast.lane.b32.xlu0 %v925, %s934
          %v936 = vpop.permute.xlu0 %935
          %v937 = vmul.f32 %v913, %v904
          %v938 = vmul.f32 %v917, %v905
          %v939 = vmul.f32 %v921, %v906
          %v940 = vmul.f32 %v928, %v904
          %v941 = vmul.f32 %v932, %v905
          %v942 = vmul.f32 %v936, %v906
          %v943 = vsel %vm491, %v937, 0.0
          %v944 = vsel %vm491, %v938, 0.0
          %v945 = vadd.f32 %v943, %v944
          %v946 = vsel %vm491, %v939, 0.0
          %v947 = vadd.f32 %v945, %v946
          %v948 = vrot.slane %v947, 4
          %v949 = vadd.f32 %v947, %v948
          %v950 = vrot.slane %v949, 2
          %v951 = vadd.f32 %v949, %v950
          %v952 = vrot.slane %v951, 1
          %v953 = vadd.f32 %v951, %v952
          %v954 = vsel %vm491, %v940, 0.0
          %v955 = vsel %vm491, %v941, 0.0
          %v956 = vadd.f32 %v954, %v955
          %v957 = vsel %vm491, %v942, 0.0
          %v958 = vadd.f32 %v956, %v957
          %v959 = vrot.slane %v958, 4
          %v960 = vadd.f32 %v958, %v959
          %v961 = vrot.slane %v960, 2
          %v962 = vadd.f32 %v960, %v961
          %v963 = vrot.slane %v962, 1
          %v964 = vadd.f32 %v962, %v963
          %v965 = vld [vmem:[#allocation3 + $0x180] sm:$0x1]
          %v966 = vlaneseq
          %v967 = vshrl.u32 %v966, 7
          %v968 = vsub.s32 0, %v967
          %v969 = vrot.slane %v965, %v968
          %v970 = vadd.f32 %v953, %v969
          %v971 = vadd.f32 %v964, %v969
          %v972 = vmax.f32 %v970, 0.0
          %v973 = vmax.f32 %v971, 0.0
          %v974 = vld [vmem:[#allocation3 + $0x188] sm:$0xff]
          %v975 = vld [vmem:[#allocation3 + $0x190] sm:$0xff]
          %v976 = vlaneseq
          %v977 = vshrl.u32 %v976, 7
          %v978 = vsub.s32 0, %v977
          %v979 = vrot.slane %v972, %v978
          %981 = vbcast.lane.b32.xlu0 %v979, 256
          %v982 = vpop.permute.xlu0 %981
          %s984 = sor.u32 256, 8
          %985 = vbcast.lane.b32.xlu0 %v979, %s984
          %v986 = vpop.permute.xlu0 %985
          %v987 = vlaneseq
          %v988 = vshrl.u32 %v987, 7
          %v989 = vsub.s32 0, %v988
          %v990 = vrot.slane %v973, %v989
          %992 = vbcast.lane.b32.xlu0 %v990, 256
          %v993 = vpop.permute.xlu0 %992
          %s995 = sor.u32 256, 8
          %996 = vbcast.lane.b32.xlu0 %v990, %s995
          %v997 = vpop.permute.xlu0 %996
          %v998 = vmul.f32 %v982, %v974
          %v999 = vmul.f32 %v986, %v975
          %v1000 = vmul.f32 %v993, %v974
          %v1001 = vmul.f32 %v997, %v975
          %v1002 = vsel %vm862, %v998, 0.0
          %v1003 = vsel %vm862, %v999, 0.0
          %v1004 = vadd.f32 %v1002, %v1003
          %v1005 = vrot.slane %v1004, 4
          %v1006 = vadd.f32 %v1004, %v1005
          %v1007 = vrot.slane %v1006, 2
          %v1008 = vadd.f32 %v1006, %v1007
          %v1009 = vrot.slane %v1008, 1
          %v1010 = vadd.f32 %v1008, %v1009
          %v1011 = vsel %vm862, %v1000, 0.0
          %v1012 = vsel %vm862, %v1001, 0.0
          %v1013 = vadd.f32 %v1011, %v1012
          %v1014 = vrot.slane %v1013, 4
          %v1015 = vadd.f32 %v1013, %v1014
          %v1016 = vrot.slane %v1015, 2
          %v1017 = vadd.f32 %v1015, %v1016
          %v1018 = vrot.slane %v1017, 1
          %v1019 = vadd.f32 %v1017, %v1018
          %v1020 = vld [vmem:[#allocation3 + $0x198] sm:$0x1]
          %v1021 = vlaneseq
          %v1022 = vshrl.u32 %v1021, 7
          %v1023 = vsub.s32 0, %v1022
          %v1024 = vrot.slane %v1020, %v1023
          %v1025 = vadd.f32 %v1010, %v1024
          %v1026 = vadd.f32 %v1019, %v1024
          %v1029 = vrot.slane %v1026, 7
          %v1030 = vsel %vm896, %v1029, %v1025
          %1032 = vst.msk [vmem:[#allocation6] sm:$0x3] %vm864, %v1030
        $region64: #{tpu_custom_call.1} parent=43 // pred_fallthru
          _
        // Predicated region
        $region65: #{tpu_custom_call.1} parent=43 // pred_check
          %p1033 = pneg %p175
        $region66: #{tpu_custom_call.1} parent=43 // pred_check_branch
          %1035 = sbr.rel (%p1033) target = $region68
        $region67: #{tpu_custom_call.1} parent=43 // pred_region
          %s1037 = ssub.s32 32, 32
          %1038 = vsyncadd [#allocation5], %s1037
          %s1040 = sshll.u32 [#allocation6], 4
          %s1041 = int_to_ptr.vmem [resolvable:$true] %s1040
          %1043 = dma.vmem_to_hbm [thread:$0]  %s1041, 32, %s6, [#allocation5]
        $region68: #{tpu_custom_call.1} parent=43 // pred_fallthru
          _
        // Predicated region
        $region69: #{tpu_custom_call.1} parent=43 // pred_check
          %p1044 = pneg %p175
        $region70: #{tpu_custom_call.1} parent=43 // pred_check_branch
          %1046 = sbr.rel (%p1044) target = $region72
        $region71: #{tpu_custom_call.1} parent=43 // pred_region
          %1047 = dma.done [#allocation5], 32
        $region72: #{tpu_custom_call.1} parent=43 // pred_fallthru
          _
      $region44: #{tpu_custom_call.1} parent=5 // pred_fallthru
        _
      %p1048 = scmp.le.s32.totalorder 2, %s14
      // Predicated region
      $region73: #{tpu_custom_call.1} parent=5 // pred_check
        %p1049 = pneg %p1048
      $region74: #{tpu_custom_call.1} parent=5 // pred_check_branch
        %1051 = sbr.rel (%p1049) target = $region76
      $region75: #{tpu_custom_call.1} parent=5 // pred_region
        %s1052 = ssub.s32 %s14, 2
      $region76: #{tpu_custom_call.1} parent=5 // pred_fallthru
        _
    $region6: #{tpu_custom_call.1} parent=1 // loop_footer
      %s18 = sadd.s32 1, %s14
    $region7: #{tpu_custom_call.1} parent=1 // loop_footer_branch
      %13 = sbr.rel target = $region3
    $region8: #{tpu_custom_call.1} parent=1 // loop_exit
      _
    %1053 = vsyncpa [#allocation4], 1
    %s1054 = scalar_lea.sflag [#allocation4], 1
    %1055 = vsyncpa %s1054, 1
    %1056 = vsyncpa [#allocation5], 1
    %s1057 = scalar_lea.sflag [#allocation5], 1
    %1058 = vsyncpa %s1057, 1

</llo_original>
